<compile_context>
chip_gen: v5e
topology: v5e:2x2
jax: 0.10.0
libtpu: 0.0.40
codegen_flags: <defaults>
</compile_context>

<pallas_src>
import functools
import math

import jax
import jax.numpy as jnp
from jax.experimental import pallas as pl
from jax.experimental.pallas import tpu as pltpu

EPS = 1e-5                                  # torch.nn.BatchNorm1d default eps
_MAX_VPU_GROUP = 4                          # g <= 4 -> VPU path; g > 4 -> MXU (HIGH)
_TARGET_OUT_TILE_BYTES = 4 * 1024 * 1024    # aim for ~4 MiB output blocks
_VMEM_HEADROOM = 8 * 1024 * 1024            # slack left for Mosaic-internal scratch


def _round_up(x, m):
    return (x + m - 1) // m * m


def _vmem_limit_bytes():
    """Per-generation scoped-VMEM limit: ~half of physical, clamped to [32, 96] MiB."""
    phys = 64 * 1024 * 1024                 # conservative default (v7x per-TC VMEM)
    try:
        phys = int(getattr(pltpu.get_tpu_info(), "vmem_capacity_bytes", phys)) or phys
    except Exception:
        pass
    return int(min(96 * 1024 * 1024, max(32 * 1024 * 1024, phys // 2)))


def _pick_tb(B, Fp, D, out_itemsize, expand_bytes, budget):
    """Batch-tile size: biggest tile under the budget, targeting ~4 MiB output blocks."""
    row_out = Fp * D * out_itemsize          # output bytes per batch row
    row_in = Fp * 4                          # x bytes per batch row (f32)
    per_row = 2 * (row_out + row_in)         # double-buffered input + output
    fixed = 2 * (2 * Fp * 4) + 2 * expand_bytes   # a, c, expansion operand (2x: conservative)
    avail = max(budget - fixed, 8 * per_row)
    tb_cap = max(8, int(avail // per_row))
    tb_target = max(8, -(-_TARGET_OUT_TILE_BYTES // row_out))   # ceil-div
    tb = min(tb_cap, tb_target)
    tb = max(8, (tb // 8) * 8)
    tb = min(tb, _round_up(B, 8))
    return max(8, (tb // 8) * 8)


def _expand_kernel(x_ref, a_ref, c_ref, e_ref, out_ref, *, fq, g, gw, use_mxu):
    """One batch tile: y = x * a + c, then lane-dense expansion out[b, f*D+d] = y[b,f]*W[d].

    x_ref   : (tb, Fp)       dense features for this batch tile
    a_ref   : (1, Fp)        folded BN scale  (gamma * rsqrt(var + eps))
    c_ref   : (1, Fp)        folded BN shift  (beta - mean * scale)
    e_ref   : expansion operand -- (Fp, Fp*D) block-diagonal W (MXU path)
                                   or tiny (g, g*D) grouped W (VPU path)
    out_ref : (tb, Fp*D)     lane-dense output tile (Fp*D is a multiple of 128)
    """
    y = x_ref[...].astype(jnp.float32) * a_ref[...] + c_ref[...]       # (tb, Fp)

    if use_mxu:
        # MXU expansion.  HIGH (bf16x3) is plenty: every output column has exactly
        # one nonzero contraction term (the rest multiply exact zeros).
        out_ref[...] = jnp.dot(
            y, e_ref[...],
            preferred_element_type=jnp.float32,
            precision=jax.lax.Precision.HIGH,
        ).astype(out_ref.dtype)
    else:
        # Pure-VPU expansion: for each group of g features,
        #   out[:, q*gw + k*D + d] = y[:, q*g + k] * W[d]
        # built as g broadcast multiply-adds against rows of the tiny (g, g*D)
        # operand, then one unmasked gw-wide (multiple of 128 lanes) store.
        e = e_ref[...]                                                   # (g, gw)
        for q in range(fq):
            base = q * g
            acc = y[:, base:base + 1] * e[0:1, :]
            for k in range(1, g):
                acc = acc + y[:, base + k:base + k + 1] * e[k:k + 1, :]
            out_ref[:, q * gw:(q + 1) * gw] = acc.astype(out_ref.dtype)


def dense_embedding(x, gamma, beta, w, *, out_dtype=jnp.float32):
    """Pallas forward of DenseEmbedding.

    x:     (B, F)  dense features
    gamma: (F,)    BatchNorm1d weight
    beta:  (F,)    BatchNorm1d bias
    w:     (1, D)  nn.Embedding(1, D).weight
    returns (B, F, D) with dtype `out_dtype` (bf16 halves the HBM-write roofline).
    """
    B, F = x.shape
    D = w.shape[-1]
    w_vec = w.reshape(-1).astype(jnp.float32)

    # ---- BatchNorm1d training-mode statistics, folded into y = x * a + c.
    # Hoisted out of the kernel (O(B*F), 1/D of the output traffic) so the Pallas
    # grid is fully parallel (v7x megacore splits the batch axis).
    # TODO(synk): running_mean / running_var buffer updates are not produced
    #             (forward output matches training-mode batch-stat normalization).
    xf = x.astype(jnp.float32)
    mean = jnp.mean(xf, axis=0)
    var = jnp.mean(jnp.square(xf - mean[None, :]), axis=0)    # biased, as BN training
    a = gamma.astype(jnp.float32) * jax.lax.rsqrt(var + EPS)
    c = beta.astype(jnp.float32) - mean * a

    # ---- Feature grouping: pack g features per output lane-group so the lane width
    # g*D is a multiple of 128 (unmasked vector stores).  Pad F only up to g.
    g = 128 // math.gcd(D, 128)
    Fp = _round_up(F, g)
    gw = g * D                      # lane width of one feature group (multiple of 128)
    fq = Fp // g                    # feature groups per row

    limit = _vmem_limit_bytes()
    budget = limit - _VMEM_HEADROOM

    use_mxu = g > _MAX_VPU_GROUP
    if use_mxu and Fp * Fp * D * 4 > budget // 4:
        # Guard: never let a (Fp, Fp*D) block-diagonal operand blow VMEM; fall back
        # to the grouped-VPU expansion whose operand is at most (g, g*D).
        use_mxu = False

    if use_mxu:
        eye = jnp.eye(Fp, dtype=jnp.float32)
        expand = (eye[:, :, None] * w_vec[None, None, :]).reshape(Fp, Fp * D)
    else:
        eye = jnp.eye(g, dtype=jnp.float32)
        expand = (eye[:, :, None] * w_vec[None, None, :]).reshape(g, gw)
    expand_bytes = int(expand.size) * 4

    out_itemsize = jnp.dtype(out_dtype).itemsize
    tb = _pick_tb(B, Fp, D, out_itemsize, expand_bytes, budget)
    Bp = _round_up(B, tb)

    xp = x
    if Bp != B or Fp != F:
        xp = jnp.pad(x, ((0, Bp - B), (0, Fp - F)))     # padded rows/cols sliced off below
    ap = jnp.pad(a, (0, Fp - F)).reshape(1, Fp)
    cp = jnp.pad(c, (0, Fp - F)).reshape(1, Fp)

    kernel = functools.partial(_expand_kernel, fq=fq, g=g, gw=gw, use_mxu=use_mxu)

    out2d = pl.pallas_call(
        kernel,
        out_shape=jax.ShapeDtypeStruct((Bp, Fp * D), out_dtype),
        grid_spec=pltpu.PrefetchScalarGridSpec(
            num_scalar_prefetch=0,
            grid=(Bp // tb,),                        # single batch-tile axis
            in_specs=[
                pl.BlockSpec((tb, Fp), lambda i: (i, 0)),
                pl.BlockSpec((1, Fp), lambda i: (0, 0)),
                pl.BlockSpec((1, Fp), lambda i: (0, 0)),
                pl.BlockSpec(expand.shape, lambda i: (0, 0)),
            ],
            out_specs=pl.BlockSpec((tb, Fp * D), lambda i: (i, 0)),
        ),
        compiler_params=pltpu.CompilerParams(
            dimension_semantics=("parallel",),       # megacore-splittable on v7x
            vmem_limit_bytes=limit,
        ),
    )(xp, ap, cp, expand)

    return out2d.reshape(Bp, Fp, D)[:B, :F, :]


def reference(x, gamma, beta, w):
    xf = x.astype(jnp.float32)
    mean = jnp.mean(xf, axis=0, keepdims=True)
    var = jnp.mean((xf - mean) ** 2, axis=0, keepdims=True)
    y = (xf - mean) / jnp.sqrt(var + EPS) * gamma[None, :] + beta[None, :]
    return y[:, :, None] * w.reshape(-1)[None, None, :]


if __name__ == "__main__":
    key = jax.random.PRNGKey(0)
    configs = [
        (16, 16, 32),    # g = 4  -> pure-VPU expansion path
        (16, 13, 8),     # g = 16 -> grouped MXU path (precision=HIGH), ragged F padded
        (8, 4, 128),     # g = 1  -> lane-native broadcast path (D multiple of 128)
    ]
    for (B, F, D) in configs:
        key, kx, kw, kg, kb = jax.random.split(key, 5)
        x = jax.random.normal(kx, (B, F), dtype=jnp.float32) * 2.0 + 0.5
        w = jax.random.normal(kw, (1, D), dtype=jnp.float32)                 # Embedding(1, D)
        gamma = 1.0 + 0.1 * jax.random.normal(kg, (F,), dtype=jnp.float32)   # BN weight
        beta = 0.1 * jax.random.normal(kb, (F,), dtype=jnp.float32)          # BN bias

        out = jax.block_until_ready(dense_embedding(x, gamma, beta, w))
        ref = reference(x, gamma, beta, w)
        assert out.shape == (B, F, D)
        assert jnp.allclose(out, ref, atol=2e-5, rtol=2e-5), f"mismatch at {(B, F, D)}"

    # Optional bf16 output (halves the HBM write traffic that bounds this kernel).
    out_bf16 = jax.block_until_ready(
        dense_embedding(x, gamma, beta, w, out_dtype=jnp.bfloat16))
    assert out_bf16.dtype == jnp.bfloat16
    assert jnp.allclose(out_bf16.astype(jnp.float32), reference(x, gamma, beta, w),
                        atol=5e-2, rtol=5e-2)

    print("KERNEL_OK")
</pallas_src>

<mosaic_0001>
module attributes {stable_mosaic.version = 11 : i64} {
  func.func @_expand_kernel(%arg0: i32, %arg1: memref<16x16xf32, #tpu.memory_space<vmem>>, %arg2: memref<1x16xf32, #tpu.memory_space<vmem>>, %arg3: memref<1x16xf32, #tpu.memory_space<vmem>>, %arg4: memref<4x128xf32, #tpu.memory_space<vmem>>, %arg5: memref<16x512xf32, #tpu.memory_space<vmem>>) attributes {dimension_semantics = [#tpu.dimension_semantics<parallel>], iteration_bounds = array<i64: 1>, scalar_prefetch = 0 : i64, scratch_operands = 0 : i64, tpu.core_type = #tpu.core_type<tc>, window_params = [{transform_indices = @transform_0, window_bounds = array<i64: 16, 16>}, {pipeline_mode = #tpu.pipeline_mode<synchronous>, transform_indices = @transform_1, window_bounds = array<i64: 1, 16>}, {pipeline_mode = #tpu.pipeline_mode<synchronous>, transform_indices = @transform_2, window_bounds = array<i64: 1, 16>}, {pipeline_mode = #tpu.pipeline_mode<synchronous>, transform_indices = @transform_3, window_bounds = array<i64: 4, 128>}, {transform_indices = @transform_4, window_bounds = array<i64: 16, 512>}]} {
    %c0 = arith.constant 0 : index
    %c0_0 = arith.constant 0 : index
    %0 = vector.load %arg1[%c0, %c0_0] : memref<16x16xf32, #tpu.memory_space<vmem>>, vector<16x16xf32>
    %c0_1 = arith.constant 0 : index
    %c0_2 = arith.constant 0 : index
    %1 = vector.load %arg2[%c0_1, %c0_2] : memref<1x16xf32, #tpu.memory_space<vmem>>, vector<1x16xf32>
    %2 = vector.broadcast %1 : vector<1x16xf32> to vector<16x16xf32>
    %3 = arith.mulf %0, %2 : vector<16x16xf32>
    %c0_3 = arith.constant 0 : index
    %c0_4 = arith.constant 0 : index
    %4 = vector.load %arg3[%c0_3, %c0_4] : memref<1x16xf32, #tpu.memory_space<vmem>>, vector<1x16xf32>
    %5 = vector.broadcast %4 : vector<1x16xf32> to vector<16x16xf32>
    %6 = arith.addf %3, %5 : vector<16x16xf32>
    %c0_5 = arith.constant 0 : index
    %c0_6 = arith.constant 0 : index
    %7 = vector.load %arg4[%c0_5, %c0_6] : memref<4x128xf32, #tpu.memory_space<vmem>>, vector<4x128xf32>
    %8 = vector.extract_strided_slice %6 {offsets = [0, 0], sizes = [16, 1], strides = [1, 1]} : vector<16x16xf32> to vector<16x1xf32>
    %9 = vector.extract_strided_slice %7 {offsets = [0, 0], sizes = [1, 128], strides = [1, 1]} : vector<4x128xf32> to vector<1x128xf32>
    %10 = vector.broadcast %8 : vector<16x1xf32> to vector<16x128xf32>
    %11 = vector.broadcast %9 : vector<1x128xf32> to vector<16x128xf32>
    %12 = arith.mulf %10, %11 : vector<16x128xf32>
    %13 = vector.extract_strided_slice %6 {offsets = [0, 1], sizes = [16, 1], strides = [1, 1]} : vector<16x16xf32> to vector<16x1xf32>
    %14 = vector.extract_strided_slice %7 {offsets = [1, 0], sizes = [1, 128], strides = [1, 1]} : vector<4x128xf32> to vector<1x128xf32>
    %15 = vector.broadcast %13 : vector<16x1xf32> to vector<16x128xf32>
    %16 = vector.broadcast %14 : vector<1x128xf32> to vector<16x128xf32>
    %17 = arith.mulf %15, %16 : vector<16x128xf32>
    %18 = arith.addf %12, %17 : vector<16x128xf32>
    %19 = vector.extract_strided_slice %6 {offsets = [0, 2], sizes = [16, 1], strides = [1, 1]} : vector<16x16xf32> to vector<16x1xf32>
    %20 = vector.extract_strided_slice %7 {offsets = [2, 0], sizes = [1, 128], strides = [1, 1]} : vector<4x128xf32> to vector<1x128xf32>
    %21 = vector.broadcast %19 : vector<16x1xf32> to vector<16x128xf32>
    %22 = vector.broadcast %20 : vector<1x128xf32> to vector<16x128xf32>
    %23 = arith.mulf %21, %22 : vector<16x128xf32>
    %24 = arith.addf %18, %23 : vector<16x128xf32>
    %25 = vector.extract_strided_slice %6 {offsets = [0, 3], sizes = [16, 1], strides = [1, 1]} : vector<16x16xf32> to vector<16x1xf32>
    %26 = vector.extract_strided_slice %7 {offsets = [3, 0], sizes = [1, 128], strides = [1, 1]} : vector<4x128xf32> to vector<1x128xf32>
    %27 = vector.broadcast %25 : vector<16x1xf32> to vector<16x128xf32>
    %28 = vector.broadcast %26 : vector<1x128xf32> to vector<16x128xf32>
    %29 = arith.mulf %27, %28 : vector<16x128xf32>
    %30 = arith.addf %24, %29 : vector<16x128xf32>
    %c0_7 = arith.constant 0 : index
    %c0_8 = arith.constant 0 : index
    %31 = vector.load %arg5[%c0_7, %c0_8] : memref<16x512xf32, #tpu.memory_space<vmem>>, vector<16x128xf32>
    tpu.vector_store %arg5[%c0_7, %c0_8], %30 {strides = array<i32>} : memref<16x512xf32, #tpu.memory_space<vmem>>, vector<16x128xf32>,
    %32 = vector.extract_strided_slice %6 {offsets = [0, 4], sizes = [16, 1], strides = [1, 1]} : vector<16x16xf32> to vector<16x1xf32>
    %33 = vector.extract_strided_slice %7 {offsets = [0, 0], sizes = [1, 128], strides = [1, 1]} : vector<4x128xf32> to vector<1x128xf32>
    %34 = vector.broadcast %32 : vector<16x1xf32> to vector<16x128xf32>
    %35 = vector.broadcast %33 : vector<1x128xf32> to vector<16x128xf32>
    %36 = arith.mulf %34, %35 : vector<16x128xf32>
    %37 = vector.extract_strided_slice %6 {offsets = [0, 5], sizes = [16, 1], strides = [1, 1]} : vector<16x16xf32> to vector<16x1xf32>
    %38 = vector.extract_strided_slice %7 {offsets = [1, 0], sizes = [1, 128], strides = [1, 1]} : vector<4x128xf32> to vector<1x128xf32>
    %39 = vector.broadcast %37 : vector<16x1xf32> to vector<16x128xf32>
    %40 = vector.broadcast %38 : vector<1x128xf32> to vector<16x128xf32>
    %41 = arith.mulf %39, %40 : vector<16x128xf32>
    %42 = arith.addf %36, %41 : vector<16x128xf32>
    %43 = vector.extract_strided_slice %6 {offsets = [0, 6], sizes = [16, 1], strides = [1, 1]} : vector<16x16xf32> to vector<16x1xf32>
    %44 = vector.extract_strided_slice %7 {offsets = [2, 0], sizes = [1, 128], strides = [1, 1]} : vector<4x128xf32> to vector<1x128xf32>
    %45 = vector.broadcast %43 : vector<16x1xf32> to vector<16x128xf32>
    %46 = vector.broadcast %44 : vector<1x128xf32> to vector<16x128xf32>
    %47 = arith.mulf %45, %46 : vector<16x128xf32>
    %48 = arith.addf %42, %47 : vector<16x128xf32>
    %49 = vector.extract_strided_slice %6 {offsets = [0, 7], sizes = [16, 1], strides = [1, 1]} : vector<16x16xf32> to vector<16x1xf32>
    %50 = vector.extract_strided_slice %7 {offsets = [3, 0], sizes = [1, 128], strides = [1, 1]} : vector<4x128xf32> to vector<1x128xf32>
    %51 = vector.broadcast %49 : vector<16x1xf32> to vector<16x128xf32>
    %52 = vector.broadcast %50 : vector<1x128xf32> to vector<16x128xf32>
    %53 = arith.mulf %51, %52 : vector<16x128xf32>
    %54 = arith.addf %48, %53 : vector<16x128xf32>
    %c0_9 = arith.constant 0 : index
    %c128 = arith.constant 128 : index
    %55 = vector.load %arg5[%c0_9, %c128] : memref<16x512xf32, #tpu.memory_space<vmem>>, vector<16x128xf32>
    tpu.vector_store %arg5[%c0_9, %c128], %54 {strides = array<i32>} : memref<16x512xf32, #tpu.memory_space<vmem>>, vector<16x128xf32>,
    %56 = vector.extract_strided_slice %6 {offsets = [0, 8], sizes = [16, 1], strides = [1, 1]} : vector<16x16xf32> to vector<16x1xf32>
    %57 = vector.extract_strided_slice %7 {offsets = [0, 0], sizes = [1, 128], strides = [1, 1]} : vector<4x128xf32> to vector<1x128xf32>
    %58 = vector.broadcast %56 : vector<16x1xf32> to vector<16x128xf32>
    %59 = vector.broadcast %57 : vector<1x128xf32> to vector<16x128xf32>
    %60 = arith.mulf %58, %59 : vector<16x128xf32>
    %61 = vector.extract_strided_slice %6 {offsets = [0, 9], sizes = [16, 1], strides = [1, 1]} : vector<16x16xf32> to vector<16x1xf32>
    %62 = vector.extract_strided_slice %7 {offsets = [1, 0], sizes = [1, 128], strides = [1, 1]} : vector<4x128xf32> to vector<1x128xf32>
    %63 = vector.broadcast %61 : vector<16x1xf32> to vector<16x128xf32>
    %64 = vector.broadcast %62 : vector<1x128xf32> to vector<16x128xf32>
    %65 = arith.mulf %63, %64 : vector<16x128xf32>
    %66 = arith.addf %60, %65 : vector<16x128xf32>
    %67 = vector.extract_strided_slice %6 {offsets = [0, 10], sizes = [16, 1], strides = [1, 1]} : vector<16x16xf32> to vector<16x1xf32>
    %68 = vector.extract_strided_slice %7 {offsets = [2, 0], sizes = [1, 128], strides = [1, 1]} : vector<4x128xf32> to vector<1x128xf32>
    %69 = vector.broadcast %67 : vector<16x1xf32> to vector<16x128xf32>
    %70 = vector.broadcast %68 : vector<1x128xf32> to vector<16x128xf32>
    %71 = arith.mulf %69, %70 : vector<16x128xf32>
    %72 = arith.addf %66, %71 : vector<16x128xf32>
    %73 = vector.extract_strided_slice %6 {offsets = [0, 11], sizes = [16, 1], strides = [1, 1]} : vector<16x16xf32> to vector<16x1xf32>
    %74 = vector.extract_strided_slice %7 {offsets = [3, 0], sizes = [1, 128], strides = [1, 1]} : vector<4x128xf32> to vector<1x128xf32>
    %75 = vector.broadcast %73 : vector<16x1xf32> to vector<16x128xf32>
    %76 = vector.broadcast %74 : vector<1x128xf32> to vector<16x128xf32>
    %77 = arith.mulf %75, %76 : vector<16x128xf32>
    %78 = arith.addf %72, %77 : vector<16x128xf32>
    %c0_10 = arith.constant 0 : index
    %c256 = arith.constant 256 : index
    %79 = vector.load %arg5[%c0_10, %c256] : memref<16x512xf32, #tpu.memory_space<vmem>>, vector<16x128xf32>
    tpu.vector_store %arg5[%c0_10, %c256], %78 {strides = array<i32>} : memref<16x512xf32, #tpu.memory_space<vmem>>, vector<16x128xf32>,
    %80 = vector.extract_strided_slice %6 {offsets = [0, 12], sizes = [16, 1], strides = [1, 1]} : vector<16x16xf32> to vector<16x1xf32>
    %81 = vector.extract_strided_slice %7 {offsets = [0, 0], sizes = [1, 128], strides = [1, 1]} : vector<4x128xf32> to vector<1x128xf32>
    %82 = vector.broadcast %80 : vector<16x1xf32> to vector<16x128xf32>
    %83 = vector.broadcast %81 : vector<1x128xf32> to vector<16x128xf32>
    %84 = arith.mulf %82, %83 : vector<16x128xf32>
    %85 = vector.extract_strided_slice %6 {offsets = [0, 13], sizes = [16, 1], strides = [1, 1]} : vector<16x16xf32> to vector<16x1xf32>
    %86 = vector.extract_strided_slice %7 {offsets = [1, 0], sizes = [1, 128], strides = [1, 1]} : vector<4x128xf32> to vector<1x128xf32>
    %87 = vector.broadcast %85 : vector<16x1xf32> to vector<16x128xf32>
    %88 = vector.broadcast %86 : vector<1x128xf32> to vector<16x128xf32>
    %89 = arith.mulf %87, %88 : vector<16x128xf32>
    %90 = arith.addf %84, %89 : vector<16x128xf32>
    %91 = vector.extract_strided_slice %6 {offsets = [0, 14], sizes = [16, 1], strides = [1, 1]} : vector<16x16xf32> to vector<16x1xf32>
    %92 = vector.extract_strided_slice %7 {offsets = [2, 0], sizes = [1, 128], strides = [1, 1]} : vector<4x128xf32> to vector<1x128xf32>
    %93 = vector.broadcast %91 : vector<16x1xf32> to vector<16x128xf32>
    %94 = vector.broadcast %92 : vector<1x128xf32> to vector<16x128xf32>
    %95 = arith.mulf %93, %94 : vector<16x128xf32>
    %96 = arith.addf %90, %95 : vector<16x128xf32>
    %97 = vector.extract_strided_slice %6 {offsets = [0, 15], sizes = [16, 1], strides = [1, 1]} : vector<16x16xf32> to vector<16x1xf32>
    %98 = vector.extract_strided_slice %7 {offsets = [3, 0], sizes = [1, 128], strides = [1, 1]} : vector<4x128xf32> to vector<1x128xf32>
    %99 = vector.broadcast %97 : vector<16x1xf32> to vector<16x128xf32>
    %100 = vector.broadcast %98 : vector<1x128xf32> to vector<16x128xf32>
    %101 = arith.mulf %99, %100 : vector<16x128xf32>
    %102 = arith.addf %96, %101 : vector<16x128xf32>
    %c0_11 = arith.constant 0 : index
    %c384 = arith.constant 384 : index
    %103 = vector.load %arg5[%c0_11, %c384] : memref<16x512xf32, #tpu.memory_space<vmem>>, vector<16x128xf32>
    tpu.vector_store %arg5[%c0_11, %c384], %102 {strides = array<i32>} : memref<16x512xf32, #tpu.memory_space<vmem>>, vector<16x128xf32>,
    return
  }
  func.func @transform_0(%arg0: i32) -> (i32, i32) {
    %c0_i32 = arith.constant 0 : i32
    %c0_i32_0 = arith.constant 0 : i32
    return %arg0, %c0_i32 : i32, i32
  }
  func.func @transform_1(%arg0: i32) -> (i32, i32) {
    %c0_i32 = arith.constant 0 : i32
    %c0_i32_0 = arith.constant 0 : i32
    %c0_i32_1 = arith.constant 0 : i32
    return %c0_i32, %c0_i32_0 : i32, i32
  }
  func.func @transform_2(%arg0: i32) -> (i32, i32) {
    %c0_i32 = arith.constant 0 : i32
    %c0_i32_0 = arith.constant 0 : i32
    %c0_i32_1 = arith.constant 0 : i32
    return %c0_i32, %c0_i32_0 : i32, i32
  }
  func.func @transform_3(%arg0: i32) -> (i32, i32) {
    %c0_i32 = arith.constant 0 : i32
    %c0_i32_0 = arith.constant 0 : i32
    %c0_i32_1 = arith.constant 0 : i32
    return %c0_i32, %c0_i32_0 : i32, i32
  }
  func.func @transform_4(%arg0: i32) -> (i32, i32) {
    %c0_i32 = arith.constant 0 : i32
    %c0_i32_0 = arith.constant 0 : i32
    return %arg0, %c0_i32 : i32, i32
  }
}

</mosaic_0001>

<llo_original>
// kernel: tpu_custom_call.1
$region0: #{tpu_custom_call.1}
  #allocation0 [shape = 'u32[]', space=smem, size = 0x4, offset = 0x4, fixed_abs, tag = 'smem constant byte address 0x4 - core index']
  #allocation1 [shape = 'u32[72,128]{1,0:T(1,128)}', space=vmem, size = 0x9000, scoped, tag = 'internal scratch']
  %s0 = inlined_call_operand.hbm [shape: f32[16,16], index: 0, kind: input, shape index: {}]
  %s1 = inlined_call_operand.hbm [shape: f32[1,16], index: 1, kind: input, shape index: {}]
  %s2 = inlined_call_operand.vmem [shape: f32[1,16], index: 2, kind: input, shape index: {}]
  %s3 = inlined_call_operand.hbm [shape: f32[4,128], index: 3, kind: input, shape index: {}]
  %s4 = inlined_call_operand.hbm [shape: f32[16,512], index: 4, kind: output, shape index: {}]
  %s5 = sld [smem:[#allocation0]]
  $region38: #{tpu_custom_call.1} parent=0
    _
  %s7 = ssub.s32 1, %s5
  %s8 = scalar_select 0, %s7, %s5
  $region1: #{tpu_custom_call.1} parent=0
    #allocation2 [shape = 'u8[8192]{0}', space=vmem, size = 0x2000, scoped, tag = 'input window, operand 0, single buffered']
    #allocation3 [shape = 's32[1]{0}', space=sflag, size = 0x4, scoped, tag = 'scoped memory for tpu_custom_call.1']
    #allocation4 [shape = 's32[1]{0}', space=sflag, size = 0x4, scoped, tag = 'scoped memory for tpu_custom_call.1']
    #allocation5 [shape = 'u8[512]{0}', space=vmem, size = 0x400, scoped, tag = 'input window, operand 1, single buffered']
    #allocation6 [shape = 's32[1]{0}', space=sflag, size = 0x4, scoped, tag = 'scoped memory for tpu_custom_call.1']
    #allocation7 [shape = 'u8[2048]{0}', space=vmem, size = 0x800, scoped, tag = 'input window, operand 3, single buffered']
    #allocation8 [shape = 'u8[32768]{0}', space=vmem, size = 0x8000, scoped, tag = 'output window, operand 0, single buffered']
    %9 = vsyncpa [#allocation3], 0
    %10 = vsyncpa [#allocation6], 0
    %11 = vsyncpa [#allocation4], 0
    // Predicated region
    $region2: #{tpu_custom_call.1} parent=1 // pred_check
      _
    $region3: #{tpu_custom_call.1} parent=1 // pred_check_branch
      %13 = sbr.rel (0) target = $region5
    $region4: #{tpu_custom_call.1} parent=1 // pred_region
      %15 = vsyncadd [#allocation3], 0
      %s16 = sshll.u32 %s0, 4
      %s17 = int_to_ptr.hbm [resolvable:$true] %s16
      %s18 = sshll.u32 [#allocation2], 4
      %s19 = int_to_ptr.vmem [resolvable:$true] %s18
      %24 = dma.hbm_to_vmem [thread:$0]  %s17, 256, %s19, [#allocation3], 128, 128, 8
    $region5: #{tpu_custom_call.1} parent=1 // pred_fallthru
      _
    // Predicated region
    $region6: #{tpu_custom_call.1} parent=1 // pred_check
      _
    $region7: #{tpu_custom_call.1} parent=1 // pred_check_branch
      %26 = sbr.rel (0) target = $region9
    $region8: #{tpu_custom_call.1} parent=1 // pred_region
      %28 = vsyncadd [#allocation6], 0
      %s30 = sshll.u32 %s1, 4
      %s31 = int_to_ptr.hbm [resolvable:$true] %s30
      %s32 = sshll.u32 [#allocation5], 4
      %s33 = int_to_ptr.vmem [resolvable:$true] %s32
      %35 = dma.hbm_to_vmem [thread:$0]  %s31, 16, %s33, [#allocation6]
    $region9: #{tpu_custom_call.1} parent=1 // pred_fallthru
      _
    // Predicated region
    $region10: #{tpu_custom_call.1} parent=1 // pred_check
      _
    $region11: #{tpu_custom_call.1} parent=1 // pred_check_branch
      %37 = sbr.rel (0) target = $region13
    $region12: #{tpu_custom_call.1} parent=1 // pred_region
      _
    $region13: #{tpu_custom_call.1} parent=1 // pred_fallthru
      _
    // Predicated region
    $region14: #{tpu_custom_call.1} parent=1 // pred_check
      _
    $region15: #{tpu_custom_call.1} parent=1 // pred_check_branch
      %39 = sbr.rel (0) target = $region17
    $region16: #{tpu_custom_call.1} parent=1 // pred_region
      %41 = vsyncadd [#allocation6], 0
      %s43 = sshll.u32 %s3, 4
      %s44 = int_to_ptr.hbm [resolvable:$true] %s43
      %s45 = sshll.u32 [#allocation7], 4
      %s46 = int_to_ptr.vmem [resolvable:$true] %s45
      %48 = dma.hbm_to_vmem [thread:$0]  %s44, 64, %s46, [#allocation6]
    $region17: #{tpu_custom_call.1} parent=1 // pred_fallthru
      _
    // Predicated region
    $region18: #{tpu_custom_call.1} parent=1 // pred_check
      _
    $region19: #{tpu_custom_call.1} parent=1 // pred_check_branch
      %50 = sbr.rel (0) target = $region21
    $region20: #{tpu_custom_call.1} parent=1 // pred_region
      %52 = dma.done [#allocation3], 256
    $region21: #{tpu_custom_call.1} parent=1 // pred_fallthru
      _
    // Predicated region
    $region22: #{tpu_custom_call.1} parent=1 // pred_check
      _
    $region23: #{tpu_custom_call.1} parent=1 // pred_check_branch
      %54 = sbr.rel (0) target = $region25
    $region24: #{tpu_custom_call.1} parent=1 // pred_region
      %56 = dma.done [#allocation6], 16
    $region25: #{tpu_custom_call.1} parent=1 // pred_fallthru
      _
    // Predicated region
    $region26: #{tpu_custom_call.1} parent=1 // pred_check
      _
    $region27: #{tpu_custom_call.1} parent=1 // pred_check_branch
      %58 = sbr.rel (0) target = $region29
    $region28: #{tpu_custom_call.1} parent=1 // pred_region
      %60 = dma.done [#allocation6], 64
    $region29: #{tpu_custom_call.1} parent=1 // pred_fallthru
      _
    %v61 = vld [vmem:[#allocation2] sm:$0xff]
    %v62 = vld [vmem:[#allocation2 + $0x8] sm:$0xff]
    %v63 = vld [vmem:[#allocation5] sm:$0x1]
    %v65 = vperm.slane %v63, 0
    %v67 = vmul.f32 %v61, %v65
    %v68 = vmul.f32 %v62, %v65
    %v69 = vld [vmem:[%s2] sm:$0x1]
    %v71 = vperm.slane %v69, 0
    %v73 = vadd.f32 %v67, %v71
    %v74 = vadd.f32 %v68, %v71
    %v75 = vld [vmem:[#allocation7] sm:$0xf]
    %77 = vset.pattern.permute.xlu0 0
    %78 = vperm.xlu0 %77, %v73
    %v79 = vpop.permute.xlu0 %78
    %82 = vset.pattern.permute.xlu0 0
    %83 = vperm.xlu0 %82, %v74
    %v84 = vpop.permute.xlu0 %83
    %v86 = vperm.slane %v75, 0
    %v87 = vmul.f32 %v79, %v86
    %v88 = vmul.f32 %v84, %v86
    %89 = vset.pattern.permute.xlu0 1
    %90 = vperm.xlu0 %89, %v73
    %v91 = vpop.permute.xlu0 %90
    %93 = vset.pattern.permute.xlu0 1
    %94 = vperm.xlu0 %93, %v74
    %v95 = vpop.permute.xlu0 %94
    %v97 = vperm.slane %v75, 1
    %v98 = vmul.f32 %v91, %v97
    %v99 = vmul.f32 %v95, %v97
    %v100 = vadd.f32 %v87, %v98
    %v101 = vadd.f32 %v88, %v99
    %102 = vset.pattern.permute.xlu0 2
    %103 = vperm.xlu0 %102, %v73
    %v104 = vpop.permute.xlu0 %103
    %106 = vset.pattern.permute.xlu0 2
    %107 = vperm.xlu0 %106, %v74
    %v108 = vpop.permute.xlu0 %107
    %v110 = vperm.slane %v75, 2
    %v111 = vmul.f32 %v104, %v110
    %v112 = vmul.f32 %v108, %v110
    %v113 = vadd.f32 %v100, %v111
    %v114 = vadd.f32 %v101, %v112
    %115 = vset.pattern.permute.xlu0 3
    %116 = vperm.xlu0 %115, %v73
    %v117 = vpop.permute.xlu0 %116
    %119 = vset.pattern.permute.xlu0 3
    %120 = vperm.xlu0 %119, %v74
    %v121 = vpop.permute.xlu0 %120
    %v123 = vperm.slane %v75, 3
    %v124 = vmul.f32 %v117, %v123
    %v125 = vmul.f32 %v121, %v123
    %v126 = vadd.f32 %v113, %v124
    %v127 = vadd.f32 %v114, %v125
    %128 = vst [vmem:[#allocation8] sm:$0xff] %v126
    %129 = vst [vmem:[#allocation8 + $0x20] sm:$0xff] %v127
    %130 = vset.pattern.permute.xlu0 4
    %131 = vperm.xlu0 %130, %v73
    %v132 = vpop.permute.xlu0 %131
    %134 = vset.pattern.permute.xlu0 4
    %135 = vperm.xlu0 %134, %v74
    %v136 = vpop.permute.xlu0 %135
    %v138 = vmul.f32 %v132, %v86
    %v139 = vmul.f32 %v136, %v86
    %140 = vset.pattern.permute.xlu0 5
    %141 = vperm.xlu0 %140, %v73
    %v142 = vpop.permute.xlu0 %141
    %144 = vset.pattern.permute.xlu0 5
    %145 = vperm.xlu0 %144, %v74
    %v146 = vpop.permute.xlu0 %145
    %v148 = vmul.f32 %v142, %v97
    %v149 = vmul.f32 %v146, %v97
    %v150 = vadd.f32 %v138, %v148
    %v151 = vadd.f32 %v139, %v149
    %152 = vset.pattern.permute.xlu0 6
    %153 = vperm.xlu0 %152, %v73
    %v154 = vpop.permute.xlu0 %153
    %156 = vset.pattern.permute.xlu0 6
    %157 = vperm.xlu0 %156, %v74
    %v158 = vpop.permute.xlu0 %157
    %v160 = vmul.f32 %v154, %v110
    %v161 = vmul.f32 %v158, %v110
    %v162 = vadd.f32 %v150, %v160
    %v163 = vadd.f32 %v151, %v161
    %164 = vset.pattern.permute.xlu0 7
    %165 = vperm.xlu0 %164, %v73
    %v166 = vpop.permute.xlu0 %165
    %168 = vset.pattern.permute.xlu0 7
    %169 = vperm.xlu0 %168, %v74
    %v170 = vpop.permute.xlu0 %169
    %v172 = vmul.f32 %v166, %v123
    %v173 = vmul.f32 %v170, %v123
    %v174 = vadd.f32 %v162, %v172
    %v175 = vadd.f32 %v163, %v173
    %176 = vst [vmem:[#allocation8 + $0x8] sm:$0xff] %v174
    %177 = vst [vmem:[#allocation8 + $0x28] sm:$0xff] %v175
    %178 = vset.pattern.permute.xlu0 8
    %179 = vperm.xlu0 %178, %v73
    %v180 = vpop.permute.xlu0 %179
    %182 = vset.pattern.permute.xlu0 8
    %183 = vperm.xlu0 %182, %v74
    %v184 = vpop.permute.xlu0 %183
    %v186 = vmul.f32 %v180, %v86
    %v187 = vmul.f32 %v184, %v86
    %188 = vset.pattern.permute.xlu0 9
    %189 = vperm.xlu0 %188, %v73
    %v190 = vpop.permute.xlu0 %189
    %192 = vset.pattern.permute.xlu0 9
    %193 = vperm.xlu0 %192, %v74
    %v194 = vpop.permute.xlu0 %193
    %v196 = vmul.f32 %v190, %v97
    %v197 = vmul.f32 %v194, %v97
    %v198 = vadd.f32 %v186, %v196
    %v199 = vadd.f32 %v187, %v197
    %200 = vset.pattern.permute.xlu0 10
    %201 = vperm.xlu0 %200, %v73
    %v202 = vpop.permute.xlu0 %201
    %204 = vset.pattern.permute.xlu0 10
    %205 = vperm.xlu0 %204, %v74
    %v206 = vpop.permute.xlu0 %205
    %v208 = vmul.f32 %v202, %v110
    %v209 = vmul.f32 %v206, %v110
    %v210 = vadd.f32 %v198, %v208
    %v211 = vadd.f32 %v199, %v209
    %212 = vset.pattern.permute.xlu0 11
    %213 = vperm.xlu0 %212, %v73
    %v214 = vpop.permute.xlu0 %213
    %216 = vset.pattern.permute.xlu0 11
    %217 = vperm.xlu0 %216, %v74
    %v218 = vpop.permute.xlu0 %217
    %v220 = vmul.f32 %v214, %v123
    %v221 = vmul.f32 %v218, %v123
    %v222 = vadd.f32 %v210, %v220
    %v223 = vadd.f32 %v211, %v221
    %224 = vst [vmem:[#allocation8 + $0x10] sm:$0xff] %v222
    %225 = vst [vmem:[#allocation8 + $0x30] sm:$0xff] %v223
    %226 = vset.pattern.permute.xlu0 12
    %227 = vperm.xlu0 %226, %v73
    %v228 = vpop.permute.xlu0 %227
    %230 = vset.pattern.permute.xlu0 12
    %231 = vperm.xlu0 %230, %v74
    %v232 = vpop.permute.xlu0 %231
    %v234 = vmul.f32 %v228, %v86
    %v235 = vmul.f32 %v232, %v86
    %236 = vset.pattern.permute.xlu0 13
    %237 = vperm.xlu0 %236, %v73
    %v238 = vpop.permute.xlu0 %237
    %240 = vset.pattern.permute.xlu0 13
    %241 = vperm.xlu0 %240, %v74
    %v242 = vpop.permute.xlu0 %241
    %v244 = vmul.f32 %v238, %v97
    %v245 = vmul.f32 %v242, %v97
    %v246 = vadd.f32 %v234, %v244
    %v247 = vadd.f32 %v235, %v245
    %248 = vset.pattern.permute.xlu0 14
    %249 = vperm.xlu0 %248, %v73
    %v250 = vpop.permute.xlu0 %249
    %252 = vset.pattern.permute.xlu0 14
    %253 = vperm.xlu0 %252, %v74
    %v254 = vpop.permute.xlu0 %253
    %v256 = vmul.f32 %v250, %v110
    %v257 = vmul.f32 %v254, %v110
    %v258 = vadd.f32 %v246, %v256
    %v259 = vadd.f32 %v247, %v257
    %260 = vset.pattern.permute.xlu0 15
    %261 = vperm.xlu0 %260, %v73
    %v262 = vpop.permute.xlu0 %261
    %264 = vset.pattern.permute.xlu0 15
    %265 = vperm.xlu0 %264, %v74
    %v266 = vpop.permute.xlu0 %265
    %v268 = vmul.f32 %v262, %v123
    %v269 = vmul.f32 %v266, %v123
    %v270 = vadd.f32 %v258, %v268
    %v271 = vadd.f32 %v259, %v269
    %272 = vst [vmem:[#allocation8 + $0x18] sm:$0xff] %v270
    %273 = vst [vmem:[#allocation8 + $0x38] sm:$0xff] %v271
    // Predicated region
    $region30: #{tpu_custom_call.1} parent=1 // pred_check
      _
    $region31: #{tpu_custom_call.1} parent=1 // pred_check_branch
      %275 = sbr.rel (0) target = $region33
    $region32: #{tpu_custom_call.1} parent=1 // pred_region
      %277 = vsyncadd [#allocation4], 0
      %s278 = sshll.u32 [#allocation8], 4
      %s279 = int_to_ptr.vmem [resolvable:$true] %s278
      %s280 = sshll.u32 %s4, 4
      %s281 = int_to_ptr.hbm [resolvable:$true] %s280
      %286 = dma.vmem_to_hbm [thread:$0]  %s279, 1024, %s281, [#allocation4], 512, 512, 32
    $region33: #{tpu_custom_call.1} parent=1 // pred_fallthru
      _
    // Predicated region
    $region34: #{tpu_custom_call.1} parent=1 // pred_check
      _
    $region35: #{tpu_custom_call.1} parent=1 // pred_check_branch
      %288 = sbr.rel (0) target = $region37
    $region36: #{tpu_custom_call.1} parent=1 // pred_region
      %290 = dma.done [#allocation4], 1024
    $region37: #{tpu_custom_call.1} parent=1 // pred_fallthru
      _
    %291 = vsyncpa [#allocation3], 1
    %292 = vsyncpa [#allocation6], 1
    %293 = vsyncpa [#allocation4], 1

</llo_original>
